<compile_context>
chip_gen: v6e
topology: v6e:2x2x1
jax: 0.10.0
libtpu: 0.0.40
codegen_flags: <defaults>
</compile_context>

<pallas_src>
import functools

import jax
import jax.numpy as jnp
from jax import lax
from jax.experimental import pallas as pl
from jax.experimental.pallas import tpu as pltpu

_LANES = 128


def _bce_gt_loss_kernel(scores_ref, thetas_ref, lower_ref, upper_ref,
                        out_ref, acc_ref, *, n_rows, n_cols,
                        mask_rows, mask_cols, fold_sublanes):
    tb, tn = scores_ref.shape
    i = pl.program_id(0)
    j = pl.program_id(1)

    # zero the per-row-tile accumulator at the start of the candidate loop
    @pl.when(j == 0)
    def _zero_acc():
        acc_ref[...] = jnp.zeros_like(acc_ref)

    cw = min(tn, _LANES)  # lane-chunk width

    # Band bounds: precomputed (TB,1) f32 in the wrapper; broadcast lane-wide
    # ONCE per grid step (hoisted out of the unrolled chunk loop).
    lower_b = jnp.broadcast_to(lower_ref[...].astype(jnp.float32), (tb, cw))
    upper_b = jnp.broadcast_to(upper_ref[...].astype(jnp.float32), (tb, cw))

    def accumulate(masked):
        # Row mask does not depend on the chunk -> compute once per step.
        row_ok = None
        if masked and mask_rows:
            rows = lax.broadcasted_iota(jnp.int32, (tb, cw), 0) + i * tb
            row_ok = rows < n_rows

        c0 = 0
        while c0 < tn:  # static (unrolled) chunk loop
            w = min(cw, tn - c0)
            x = scores_ref[:, c0:c0 + w].astype(jnp.float32)
            th = thetas_ref[:, c0:c0 + w].astype(jnp.float32)
            lo = lower_b if w == cw else lower_b[:, :w]
            hi = upper_b if w == cw else upper_b[:, :w]
            in_band = (th >= lo) & (th <= hi)
            # y in {0,1}  =>  x*y == where(in_band, x, 0): saves a mul + splat.
            xy = jnp.where(in_band, x, 0.0)
            # numerically stable BCE-with-logits (PyTorch formulation)
            loss = jnp.maximum(x, 0.0) - xy + jnp.log1p(jnp.exp(-jnp.abs(x)))

            if masked:
                ok = None
                if mask_rows:
                    ok = row_ok if w == cw else row_ok[:, :w]
                if mask_cols:
                    cols = (lax.broadcasted_iota(jnp.int32, (tb, w), 1)
                            + (j * tn + c0))
                    col_ok = cols < n_cols
                    ok = col_ok if ok is None else (ok & col_ok)
                if ok is not None:
                    loss = jnp.where(ok, loss, 0.0)

            if w == _LANES:
                acc_ref[...] += loss
            else:
                acc_ref[:, :w] += loss
            c0 += w

    # Predicate tail masking on the tail grid steps only.
    tail_conds = []
    if mask_rows:
        tail_conds.append(i == pl.num_programs(0) - 1)
    if mask_cols:
        tail_conds.append(j == pl.num_programs(1) - 1)

    if tail_conds:
        is_tail = tail_conds[0]
        for c in tail_conds[1:]:
            is_tail = jnp.logical_or(is_tail, c)

        @pl.when(is_tail)
        def _masked_path():
            accumulate(masked=True)

        @pl.when(jnp.logical_not(is_tail))
        def _fast_path():
            accumulate(masked=False)
    else:
        accumulate(masked=False)

    # Finalize: fold sublanes only (pure VPU vreg adds); lanes are reduced in
    # the wrapper. Output stays a lane-dense (8,128) slab per row tile.
    @pl.when(j == pl.num_programs(1) - 1)
    def _finalize():
        acc = acc_ref[...]
        if fold_sublanes:
            out_ref[...] = jnp.sum(acc.reshape(tb // 8, 8, _LANES), axis=0)
        else:
            out_ref[...] = jnp.full((8, _LANES), jnp.sum(acc),
                                    dtype=jnp.float32)


def _reference(scores, thetas, target):
    """Pure-JAX reference (also used as the tiny-input fast path)."""
    x = scores.astype(jnp.float32)
    th = thetas.astype(jnp.float32)
    gt = target[:, 0].astype(jnp.float32)
    delta = 0.05 * gt
    lower = (gt - delta)[:, None]
    upper = (gt + delta)[:, None]
    y = jnp.where((th >= lower) & (th <= upper), 1.0, 0.0)
    le = jnp.maximum(x, 0.0) - x * y + jnp.log1p(jnp.exp(-jnp.abs(x)))
    return jnp.mean(le)


def _round_up(x, m):
    return ((x + m - 1) // m) * m


def loss_classification_with_gt(scores, thetas, target, *, tb=512, tn=1024,
                                min_pallas_elements=1024):
    """Pallas equivalent of LossFunctionClassificationWithGT.forward.

    scores: (B, N) logits (any float dtype; bf16 recommended for bandwidth)
    thetas: (B, N) candidate theta values
    target: (B, T) ground truth; target[:, 0] is gt_theta
    returns: scalar f32 mean BCE-with-logits loss
    """
    B, N = scores.shape

    # Tiny-input fast path: Pallas launch/per-step overhead dwarfs the work.
    if B * N < min_pallas_elements:
        return _reference(scores, thetas, target)

    # Hoist the band computation: (B,1) f32 lower/upper computed once here.
    gt = target[:, 0:1].astype(jnp.float32)
    delta = 0.05 * gt
    lower = gt - delta
    upper = gt + delta

    # ---- row tile selection ----
    if B < 8:
        TB = B               # full dim (legal block); splat finalize
        fold = False
    else:
        TB = min(tb, (B // 8) * 8)
        if B >= 16:
            # Guarantee >= 2 blocks on the "parallel" row axis so v7x's two
            # TensorCores both get work; negligible cost on v5e/v6e.
            TB = min(TB, _round_up((B + 1) // 2, 8))
        fold = True

    TN = N if N <= tn else tn
    grid_b = pl.cdiv(B, TB)
    grid_n = pl.cdiv(N, TN)
    mask_rows = (B % TB) != 0
    mask_cols = (N % TN) != 0

    kernel = functools.partial(
        _bce_gt_loss_kernel, n_rows=B, n_cols=N,
        mask_rows=mask_rows, mask_cols=mask_cols, fold_sublanes=fold)

    # Scoped-VMEM budget: double-buffered scores+thetas tiles plus the
    # accumulator and small chunk-sized temporaries. Explicit limit keeps the
    # default tiles safe on v5e (16 MiB default) and stays within v7x's
    # 64 MiB physical VMEM.
    itemsize = max(jnp.dtype(scores.dtype).itemsize,
                   jnp.dtype(thetas.dtype).itemsize)
    in_bytes = 2 * 2 * TB * TN * itemsize
    vmem_limit = int(min(48 << 20, max(24 << 20, 2 * in_bytes + (8 << 20))))

    partials = pl.pallas_call(
        kernel,
        out_shape=jax.ShapeDtypeStruct((grid_b * 8, _LANES), jnp.float32),
        grid_spec=pltpu.PrefetchScalarGridSpec(
            num_scalar_prefetch=0,
            grid=(grid_b, grid_n),
            in_specs=[
                pl.BlockSpec((TB, TN), lambda i, j: (i, j)),   # scores
                pl.BlockSpec((TB, TN), lambda i, j: (i, j)),   # thetas
                pl.BlockSpec((TB, 1), lambda i, j: (i, 0)),    # lower
                pl.BlockSpec((TB, 1), lambda i, j: (i, 0)),    # upper
            ],
            out_specs=pl.BlockSpec((8, _LANES), lambda i, j: (i, 0)),
            scratch_shapes=[pltpu.VMEM((TB, _LANES), jnp.float32)],
        ),
        compiler_params=pltpu.CompilerParams(
            dimension_semantics=("parallel", "arbitrary"),
            vmem_limit_bytes=vmem_limit),
    )(scores, thetas, lower, upper)

    denom = float(B) * float(N)
    if not fold:
        denom *= 8.0 * float(_LANES)   # splat path replicates the tile sum
    return jnp.sum(partials) / denom


if __name__ == "__main__":
    key = jax.random.PRNGKey(0)
    k1, k2, k3 = jax.random.split(key, 3)
    T = 3  # target columns; column 0 is gt_theta

    # Case 1: aligned shapes, multi-step grid (2 row tiles x 4 candidate tiles)
    B1, N1 = 16, 512
    scores1 = jax.random.normal(k1, (B1, N1), dtype=jnp.float32)
    thetas1 = jax.random.uniform(k2, (B1, N1), dtype=jnp.float32,
                                 minval=0.0, maxval=2.0)
    target1 = jax.random.uniform(k3, (B1, T), dtype=jnp.float32,
                                 minval=0.5, maxval=1.5)
    out1 = loss_classification_with_gt(scores1, thetas1, target1, tb=8, tn=128)
    jax.block_until_ready(out1)
    ref1 = _reference(scores1, thetas1, target1)
    assert jnp.allclose(out1, ref1, atol=1e-5, rtol=1e-5), (out1, ref1)

    # Case 2: unaligned shapes + bf16 inputs -> exercises the predicated tail
    # masking on both grid axes and native-dtype DMA with in-kernel f32 cast.
    B2, N2 = 10, 200
    scores2 = jax.random.normal(k1, (B2, N2), dtype=jnp.float32).astype(jnp.bfloat16)
    thetas2 = jax.random.uniform(k2, (B2, N2), dtype=jnp.float32,
                                 minval=0.0, maxval=2.0).astype(jnp.bfloat16)
    target2 = jax.random.uniform(k3, (B2, T), dtype=jnp.float32,
                                 minval=0.5, maxval=1.5)
    out2 = loss_classification_with_gt(scores2, thetas2, target2, tb=8, tn=128)
    jax.block_until_ready(out2)
    ref2 = _reference(scores2, thetas2, target2)
    assert jnp.allclose(out2, ref2, atol=1e-5, rtol=1e-5), (out2, ref2)

    # Case 3: default tiles, larger N (single row tile split into 2 for the
    # parallel axis, multiple candidate tiles) -> exercises default config.
    B3, N3 = 32, 2304
    scores3 = jax.random.normal(k1, (B3, N3), dtype=jnp.float32)
    thetas3 = jax.random.uniform(k2, (B3, N3), dtype=jnp.float32,
                                 minval=0.0, maxval=2.0)
    target3 = jax.random.uniform(k3, (B3, T), dtype=jnp.float32,
                                 minval=0.5, maxval=1.5)
    out3 = loss_classification_with_gt(scores3, thetas3, target3)
    jax.block_until_ready(out3)
    ref3 = _reference(scores3, thetas3, target3)
    assert jnp.allclose(out3, ref3, atol=1e-5, rtol=1e-5), (out3, ref3)

    # Case 4: tiny input takes the pure-JAX fast path (no Pallas launch)
    B4, N4 = 2, 8
    scores4 = jax.random.normal(k1, (B4, N4), dtype=jnp.float32)
    thetas4 = jax.random.uniform(k2, (B4, N4), dtype=jnp.float32,
                                 minval=0.0, maxval=2.0)
    target4 = jax.random.uniform(k3, (B4, T), dtype=jnp.float32,
                                 minval=0.5, maxval=1.5)
    out4 = loss_classification_with_gt(scores4, thetas4, target4)
    jax.block_until_ready(out4)
    ref4 = _reference(scores4, thetas4, target4)
    assert jnp.allclose(out4, ref4, atol=1e-5, rtol=1e-5), (out4, ref4)

    print("KERNEL_OK")
</pallas_src>

<mosaic_0001>
module attributes {stable_mosaic.version = 11 : i64} {
  func.func @_bce_gt_loss_kernel(%arg0: i32, %arg1: i32, %arg2: memref<8x128xf32, #tpu.memory_space<vmem>>, %arg3: memref<8x128xf32, #tpu.memory_space<vmem>>, %arg4: memref<8x1xf32, #tpu.memory_space<vmem>>, %arg5: memref<8x1xf32, #tpu.memory_space<vmem>>, %arg6: memref<8x128xf32, #tpu.memory_space<vmem>>, %arg7: memref<8x128xf32, #tpu.memory_space<vmem>>) attributes {dimension_semantics = [#tpu.dimension_semantics<parallel>, #tpu.dimension_semantics<arbitrary>], iteration_bounds = array<i64: 2, 4>, scalar_prefetch = 0 : i64, scratch_operands = 1 : i64, tpu.core_type = #tpu.core_type<tc>, window_params = [{transform_indices = @transform_0, window_bounds = array<i64: 8, 128>}, {transform_indices = @transform_1, window_bounds = array<i64: 8, 128>}, {transform_indices = @transform_2, window_bounds = array<i64: 8, 1>}, {transform_indices = @transform_3, window_bounds = array<i64: 8, 1>}, {transform_indices = @transform_4, window_bounds = array<i64: 8, 128>}]} {
    %c0_i32 = arith.constant 0 : i32
    %0 = arith.cmpi eq, %arg1, %c0_i32 : i32
    %1 = arith.extui %0 : i1 to i32
    %c0_i32_0 = arith.constant 0 : i32
    %2 = arith.cmpi ne, %1, %c0_i32_0 : i32
    scf.if %2 {
      %cst_15 = arith.constant 0.000000e+00 : f32
      %31 = vector.broadcast %cst_15 : f32 to vector<8x128xf32>
      %c0_16 = arith.constant 0 : index
      %c0_17 = arith.constant 0 : index
      %32 = vector.load %arg7[%c0_16, %c0_17] : memref<8x128xf32, #tpu.memory_space<vmem>>, vector<8x128xf32>
      tpu.vector_store %arg7[%c0_16, %c0_17], %31 {strides = array<i32>} : memref<8x128xf32, #tpu.memory_space<vmem>>, vector<8x128xf32>,
    } else {
    }
    %c0 = arith.constant 0 : index
    %c0_1 = arith.constant 0 : index
    %3 = vector.load %arg4[%c0, %c0_1] : memref<8x1xf32, #tpu.memory_space<vmem>>, vector<8x1xf32>
    %4 = vector.shape_cast %3 : vector<8x1xf32> to vector<8x1xf32>
    %5 = vector.broadcast %4 : vector<8x1xf32> to vector<8x128xf32>
    %c0_2 = arith.constant 0 : index
    %c0_3 = arith.constant 0 : index
    %6 = vector.load %arg5[%c0_2, %c0_3] : memref<8x1xf32, #tpu.memory_space<vmem>>, vector<8x1xf32>
    %7 = vector.shape_cast %6 : vector<8x1xf32> to vector<8x1xf32>
    %8 = vector.broadcast %7 : vector<8x1xf32> to vector<8x128xf32>
    %c0_4 = arith.constant 0 : index
    %c0_5 = arith.constant 0 : index
    %9 = vector.load %arg2[%c0_4, %c0_5] : memref<8x128xf32, #tpu.memory_space<vmem>>, vector<8x128xf32>
    %c0_6 = arith.constant 0 : index
    %c0_7 = arith.constant 0 : index
    %10 = vector.load %arg3[%c0_6, %c0_7] : memref<8x128xf32, #tpu.memory_space<vmem>>, vector<8x128xf32>
    %11 = arith.cmpf oge, %10, %5 : vector<8x128xf32>
    %12 = arith.cmpf ole, %10, %8 : vector<8x128xf32>
    %13 = arith.andi %11, %12 : vector<8x128xi1>
    %cst = arith.constant 0.000000e+00 : f32
    %14 = vector.broadcast %cst : f32 to vector<8x128xf32>
    %15 = arith.select %13, %9, %14 : vector<8x128xi1>, vector<8x128xf32>
    %cst_8 = arith.constant 0.000000e+00 : f32
    %16 = vector.broadcast %cst_8 : f32 to vector<8x128xf32>
    %17 = arith.maximumf %9, %16 : vector<8x128xf32>
    %18 = arith.subf %17, %15 : vector<8x128xf32>
    %19 = math.absf %9 : vector<8x128xf32>
    %cst_9 = arith.constant 0.000000e+00 : f32
    %20 = vector.broadcast %cst_9 : f32 to vector<8x128xf32>
    %21 = arith.subf %20, %19 : vector<8x128xf32>
    %22 = math.exp %21 : vector<8x128xf32>
    %23 = math.log1p %22 : vector<8x128xf32>
    %24 = arith.addf %18, %23 : vector<8x128xf32>
    %c0_10 = arith.constant 0 : index
    %c0_11 = arith.constant 0 : index
    %25 = vector.load %arg7[%c0_10, %c0_11] : memref<8x128xf32, #tpu.memory_space<vmem>>, vector<8x128xf32>
    %26 = arith.addf %25, %24 : vector<8x128xf32>
    %c0_12 = arith.constant 0 : index
    %c0_13 = arith.constant 0 : index
    %27 = vector.load %arg7[%c0_12, %c0_13] : memref<8x128xf32, #tpu.memory_space<vmem>>, vector<8x128xf32>
    tpu.vector_store %arg7[%c0_12, %c0_13], %26 {strides = array<i32>} : memref<8x128xf32, #tpu.memory_space<vmem>>, vector<8x128xf32>,
    %c3_i32 = arith.constant 3 : i32
    %28 = arith.cmpi eq, %arg1, %c3_i32 : i32
    %29 = arith.extui %28 : i1 to i32
    %c0_i32_14 = arith.constant 0 : i32
    %30 = arith.cmpi ne, %29, %c0_i32_14 : i32
    scf.if %30 {
      %c0_15 = arith.constant 0 : index
      %c0_16 = arith.constant 0 : index
      %31 = vector.load %arg7[%c0_15, %c0_16] : memref<8x128xf32, #tpu.memory_space<vmem>>, vector<8x128xf32>
      %32 = vector.shape_cast %31 : vector<8x128xf32> to vector<1x8x128xf32>
      %cst_17 = arith.constant dense<0.000000e+00> : vector<8x128xf32>
      %33 = vector.multi_reduction <add>, %32, %cst_17 [0] : vector<1x8x128xf32> to vector<8x128xf32>
      %c0_18 = arith.constant 0 : index
      %c0_19 = arith.constant 0 : index
      %34 = vector.load %arg6[%c0_18, %c0_19] : memref<8x128xf32, #tpu.memory_space<vmem>>, vector<8x128xf32>
      tpu.vector_store %arg6[%c0_18, %c0_19], %33 {strides = array<i32>} : memref<8x128xf32, #tpu.memory_space<vmem>>, vector<8x128xf32>,
    } else {
    }
    return
  }
  func.func @transform_0(%arg0: i32, %arg1: i32) -> (i32, i32) {
    %c0_i32 = arith.constant 0 : i32
    return %arg0, %arg1 : i32, i32
  }
  func.func @transform_1(%arg0: i32, %arg1: i32) -> (i32, i32) {
    %c0_i32 = arith.constant 0 : i32
    return %arg0, %arg1 : i32, i32
  }
  func.func @transform_2(%arg0: i32, %arg1: i32) -> (i32, i32) {
    %c0_i32 = arith.constant 0 : i32
    %c0_i32_0 = arith.constant 0 : i32
    return %arg0, %c0_i32 : i32, i32
  }
  func.func @transform_3(%arg0: i32, %arg1: i32) -> (i32, i32) {
    %c0_i32 = arith.constant 0 : i32
    %c0_i32_0 = arith.constant 0 : i32
    return %arg0, %c0_i32 : i32, i32
  }
  func.func @transform_4(%arg0: i32, %arg1: i32) -> (i32, i32) {
    %c0_i32 = arith.constant 0 : i32
    %c0_i32_0 = arith.constant 0 : i32
    return %arg0, %c0_i32 : i32, i32
  }
}

</mosaic_0001>

<llo_original>
// kernel: tpu_custom_call.1
$region0: #{tpu_custom_call.1}
  #allocation0 [shape = 'u32[]', space=smem, size = 0x4, offset = 0x4, fixed_abs, tag = 'smem constant byte address 0x4 - core index']
  #allocation1 [shape = 'u32[144,128]{1,0:T(1,128)}', space=vmem, size = 0x12000, scoped, tag = 'internal scratch']
  #allocation2 [shape = 'f32[8,128]{1,0:T(8,128)}', space=vmem, size = 0x1000, scoped, tag = 'scratch operand']
  %s0 = inlined_call_operand.hbm [shape: f32[16,512], index: 0, kind: input, shape index: {}]
  %s1 = inlined_call_operand.hbm [shape: f32[16,512], index: 1, kind: input, shape index: {}]
  %s2 = inlined_call_operand.vmem [shape: f32[16,1], index: 2, kind: input, shape index: {}]
  %s3 = inlined_call_operand.vmem [shape: f32[16,1], index: 3, kind: input, shape index: {}]
  %s4 = inlined_call_operand.hbm [shape: f32[16,128], index: 4, kind: output, shape index: {}]
  %s5 = sld [smem:[#allocation0]]
  $region65: #{tpu_custom_call.1} parent=0
    _
  %s7 = ssub.s32 1, %s5
  %s8 = scalar_select 0, %s7, %s5
  $region1: #{tpu_custom_call.1} parent=0
    #allocation3 [shape = 'u8[8192]{0}', space=vmem, size = 0x2000, scoped, tag = 'input window, operand 0']
    #allocation4 [shape = 's32[2]{0}', space=sflag, size = 0x8, scoped, tag = 'scoped memory for tpu_custom_call.1']
    #allocation5 [shape = 's32[2]{0}', space=sflag, size = 0x8, scoped, tag = 'scoped memory for tpu_custom_call.1']
    #allocation6 [shape = 'u8[8192]{0}', space=vmem, size = 0x2000, scoped, tag = 'input window, operand 1']
    #allocation7 [shape = 's32[2]{0}', space=sflag, size = 0x8, scoped, tag = 'scoped memory for tpu_custom_call.1']
    #allocation8 [shape = 'u8[8192]{0}', space=vmem, size = 0x2000, scoped, tag = 'output window, operand 0']
    %9 = vsyncpa [#allocation4], 0
    %s10 = scalar_lea.sflag [#allocation4], 1
    %11 = vsyncpa %s10, 0
    %12 = vsyncpa [#allocation7], 0
    %s13 = scalar_lea.sflag [#allocation7], 1
    %14 = vsyncpa %s13, 0
    %15 = vsyncpa [#allocation5], 0
    %s16 = scalar_lea.sflag [#allocation5], 1
    %17 = vsyncpa %s16, 0
    loop: start=0, step=1, limit=10
    $region2: #{tpu_custom_call.1} parent=1 // loop_pre_header
      _
    $region3: #{tpu_custom_call.1} parent=1 // loop_header
      %s19 = sphi 0, %s23
      %p20 = scmp.ge.s32.totalorder %s19, 10
      %s26 = sphi 0, %s38
      %s27 = sphi 0, %s34
      %s28 = sphi 0, %s26
      %s29 = sphi 0, %s27
      %s30 = sphi 0, %s28
      %s31 = sphi 0, %s29
      %s43 = sphi 0, %s45
      %s46 = sphi 0, %s43
      %s47 = sphi 0, %s46
      %s63 = sphi 0, %s47
      %s71 = sphi 0, %s73
      %s74 = sphi 0, %s71
      %s75 = sphi 0, %s74
      %s91 = sphi 0, %s75
      %s97 = sphi 0, %s99
      %s100 = sphi 0, %s97
      %s101 = sphi 0, %s100
      %s117 = sphi 0, %s101
      %s123 = sphi 0, %s125
      %s126 = sphi 0, %s123
      %s127 = sphi 0, %s126
      %s143 = sphi 0, %s127
      %s149 = sphi 0, %s151
      %s152 = sphi 0, %s149
      %s153 = sphi 0, %s152
      %s169 = sphi 0, %s153
    $region4: #{tpu_custom_call.1} parent=1 // loop_header_branch
      %22 = sbr.rel (%p20) target = $region8
    $region5: #{tpu_custom_call.1} parent=1 // loop_body
      %s24 = ssub.s32 %s19, 1
      %s25 = ssub.s32 %s19, 2
      %s32 = sadd.s32 1, %s27
      %p33 = scmp.ge.s32.totalorder %s32, 4
      %s34 = scalar_select %p33, 0, %s32
      %s35 = sadd.s32 1, %s26
      %s36 = scalar_select %p33, %s35, %s26
      %p37 = scmp.ge.s32.totalorder %s36, 2
      %s38 = scalar_select %p37, 0, %s36
      %s39 = ssub.s32 %s26, %s38
      %s40 = ssub.s32 %s27, %s34
      %s41 = sor.u32 %s39, %s40
      %p42 = scmp.eq.s32.totalorder %s41, 0
      %s44 = sadd.s32 %s43, 1
      %s45 = scalar_select %p42, %s43, %s44
      %p48 = pneg %p42
      %p49 = scmp.eq.s32.totalorder %s19, 7
      %p50 = por %p48, %p49
      %p51 = scmp.ne.s32.totalorder %s43, %s46
      %p52 = scmp.eq.s32.totalorder %s19, 0
      %p53 = por %p51, %p52
      %p54 = scmp.ne.s32.totalorder %s43, %s46
      %p55 = scmp.eq.s32.totalorder %s24, 7
      %p56 = por %p54, %p55
      %p57 = scmp.ne.s32.totalorder %s46, %s47
      %p58 = scmp.eq.s32.totalorder %s24, 0
      %p59 = por %p57, %p58
      %p60 = scmp.ne.s32.totalorder %s46, %s47
      %p61 = scmp.eq.s32.totalorder %s25, 7
      %p62 = por %p60, %p61
      %p64 = scmp.ne.s32.totalorder %s47, %s63
      %p65 = scmp.eq.s32.totalorder %s25, 0
      %p66 = por %p64, %p65
      %s67 = ssub.s32 %s26, %s38
      %s68 = ssub.s32 %s27, %s34
      %s69 = sor.u32 %s67, %s68
      %p70 = scmp.eq.s32.totalorder %s69, 0
      %s72 = sadd.s32 %s71, 1
      %s73 = scalar_select %p70, %s71, %s72
      %p76 = pneg %p70
      %p77 = scmp.eq.s32.totalorder %s19, 7
      %p78 = por %p76, %p77
      %p79 = scmp.ne.s32.totalorder %s71, %s74
      %p80 = scmp.eq.s32.totalorder %s19, 0
      %p81 = por %p79, %p80
      %p82 = scmp.ne.s32.totalorder %s71, %s74
      %p83 = scmp.eq.s32.totalorder %s24, 7
      %p84 = por %p82, %p83
      %p85 = scmp.ne.s32.totalorder %s74, %s75
      %p86 = scmp.eq.s32.totalorder %s24, 0
      %p87 = por %p85, %p86
      %p88 = scmp.ne.s32.totalorder %s74, %s75
      %p89 = scmp.eq.s32.totalorder %s25, 7
      %p90 = por %p88, %p89
      %p92 = scmp.ne.s32.totalorder %s75, %s91
      %p93 = scmp.eq.s32.totalorder %s25, 0
      %p94 = por %p92, %p93
      %s95 = ssub.s32 %s26, %s38
      %p96 = scmp.eq.s32.totalorder %s95, 0
      %s98 = sadd.s32 %s97, 1
      %s99 = scalar_select %p96, %s97, %s98
      %p102 = pneg %p96
      %p103 = scmp.eq.s32.totalorder %s19, 7
      %p104 = por %p102, %p103
      %p105 = scmp.ne.s32.totalorder %s97, %s100
      %p106 = scmp.eq.s32.totalorder %s19, 0
      %p107 = por %p105, %p106
      %p108 = scmp.ne.s32.totalorder %s97, %s100
      %p109 = scmp.eq.s32.totalorder %s24, 7
      %p110 = por %p108, %p109
      %p111 = scmp.ne.s32.totalorder %s100, %s101
      %p112 = scmp.eq.s32.totalorder %s24, 0
      %p113 = por %p111, %p112
      %p114 = scmp.ne.s32.totalorder %s100, %s101
      %p115 = scmp.eq.s32.totalorder %s25, 7
      %p116 = por %p114, %p115
      %p118 = scmp.ne.s32.totalorder %s101, %s117
      %p119 = scmp.eq.s32.totalorder %s25, 0
      %p120 = por %p118, %p119
      %s121 = ssub.s32 %s26, %s38
      %p122 = scmp.eq.s32.totalorder %s121, 0
      %s124 = sadd.s32 %s123, 1
      %s125 = scalar_select %p122, %s123, %s124
      %p128 = pneg %p122
      %p129 = scmp.eq.s32.totalorder %s19, 7
      %p130 = por %p128, %p129
      %p131 = scmp.ne.s32.totalorder %s123, %s126
      %p132 = scmp.eq.s32.totalorder %s19, 0
      %p133 = por %p131, %p132
      %p134 = scmp.ne.s32.totalorder %s123, %s126
      %p135 = scmp.eq.s32.totalorder %s24, 7
      %p136 = por %p134, %p135
      %p137 = scmp.ne.s32.totalorder %s126, %s127
      %p138 = scmp.eq.s32.totalorder %s24, 0
      %p139 = por %p137, %p138
      %p140 = scmp.ne.s32.totalorder %s126, %s127
      %p141 = scmp.eq.s32.totalorder %s25, 7
      %p142 = por %p140, %p141
      %p144 = scmp.ne.s32.totalorder %s127, %s143
      %p145 = scmp.eq.s32.totalorder %s25, 0
      %p146 = por %p144, %p145
      %s147 = ssub.s32 %s26, %s38
      %p148 = scmp.eq.s32.totalorder %s147, 0
      %s150 = sadd.s32 %s149, 1
      %s151 = scalar_select %p148, %s149, %s150
      %p154 = pneg %p148
      %p155 = scmp.eq.s32.totalorder %s19, 7
      %p156 = por %p154, %p155
      %p157 = scmp.ne.s32.totalorder %s149, %s152
      %p158 = scmp.eq.s32.totalorder %s19, 0
      %p159 = por %p157, %p158
      %p160 = scmp.ne.s32.totalorder %s149, %s152
      %p161 = scmp.eq.s32.totalorder %s24, 7
      %p162 = por %p160, %p161
      %p163 = scmp.ne.s32.totalorder %s152, %s153
      %p164 = scmp.eq.s32.totalorder %s24, 0
      %p165 = por %p163, %p164
      %p166 = scmp.ne.s32.totalorder %s152, %s153
      %p167 = scmp.eq.s32.totalorder %s25, 7
      %p168 = por %p166, %p167
      %p170 = scmp.ne.s32.totalorder %s153, %s169
      %p171 = scmp.eq.s32.totalorder %s25, 0
      %p172 = por %p170, %p171
      %p173 = scmp.le.s32.totalorder 1, %s19
      %p174 = scmp.lt.s32.totalorder %s19, 9
      %p175 = pnand %p173, %p174
      %p176 = pneg %p175
      // Predicated region
      $region9: #{tpu_custom_call.1} parent=5 // pred_check
        _
      $region10: #{tpu_custom_call.1} parent=5 // pred_check_branch
        %178 = sbr.rel (%p175) target = $region12
      $region11: #{tpu_custom_call.1} parent=5 // pred_region
        %s179 = ssub.s32 %s19, 1
      $region12: #{tpu_custom_call.1} parent=5 // pred_fallthru
        _
      %p180 = scmp.lt.s32.totalorder %s19, 8
      // Predicated region
      $region13: #{tpu_custom_call.1} parent=5 // pred_check
        %p181 = pneg %p180
      $region14: #{tpu_custom_call.1} parent=5 // pred_check_branch
        %183 = sbr.rel (%p181) target = $region16
      $region15: #{tpu_custom_call.1} parent=5 // pred_region
        // Predicated region
        $region17: #{tpu_custom_call.1} parent=15 // pred_check
          %p184 = pneg %p53
        $region18: #{tpu_custom_call.1} parent=15 // pred_check_branch
          %186 = sbr.rel (%p184) target = $region20
        $region19: #{tpu_custom_call.1} parent=15 // pred_region
          %s187 = sand.u32 %s43, 1
          %s188 = scalar_lea.sflag [#allocation4], %s187
          %s189 = sand.u32 %s43, 1
          %s190 = smul.addr %s189, 8
          %s191 = scalar_lea.vmem [#allocation3], %s190
          %s193 = ssub.s32 128, 128
          %194 = vsyncadd %s188, %s193
          %s195 = smul.addr %s26, 4
          %s196 = sadd.s32 %s27, %s195
          %s197 = smul.addr %s196, 128
          %s198 = scalar_lea.hbm %s0, %s197
          %s200 = sshll.u32 %s191, 4
          %s201 = int_to_ptr.vmem [resolvable:$true] %s200
          %203 = dma.hbm_to_vmem [thread:$0]  %s198, 128, %s201, %s188
        $region20: #{tpu_custom_call.1} parent=15 // pred_fallthru
          _
        // Predicated region
        $region21: #{tpu_custom_call.1} parent=15 // pred_check
          %p204 = pneg %p81
        $region22: #{tpu_custom_call.1} parent=15 // pred_check_branch
          %206 = sbr.rel (%p204) target = $region24
        $region23: #{tpu_custom_call.1} parent=15 // pred_region
          %s207 = sand.u32 %s71, 1
          %s208 = scalar_lea.sflag [#allocation7], %s207
          %s209 = sand.u32 %s71, 1
          %s210 = smul.addr %s209, 8
          %s211 = scalar_lea.vmem [#allocation6], %s210
          %s213 = ssub.s32 128, 128
          %214 = vsyncadd %s208, %s213
          %s215 = smul.addr %s26, 4
          %s216 = sadd.s32 %s27, %s215
          %s217 = smul.addr %s216, 128
          %s218 = scalar_lea.hbm %s1, %s217
          %s220 = sshll.u32 %s211, 4
          %s221 = int_to_ptr.vmem [resolvable:$true] %s220
          %223 = dma.hbm_to_vmem [thread:$0]  %s218, 128, %s221, %s208
        $region24: #{tpu_custom_call.1} parent=15 // pred_fallthru
          _
        // Predicated region
        $region25: #{tpu_custom_call.1} parent=15 // pred_check
          %p224 = pneg %p107
        $region26: #{tpu_custom_call.1} parent=15 // pred_check_branch
          %226 = sbr.rel (%p224) target = $region28
        $region27: #{tpu_custom_call.1} parent=15 // pred_region
          %p227 = scmp.lt.s32.totalorder %s26, 1
          %s228 = scalar_select %p227, %s26, 1
          %s229 = smul.addr %s228, 8
          %s230 = scalar_lea.vmem %s2, %s229
        $region28: #{tpu_custom_call.1} parent=15 // pred_fallthru
          _
        // Predicated region
        $region29: #{tpu_custom_call.1} parent=15 // pred_check
          %p231 = pneg %p133
        $region30: #{tpu_custom_call.1} parent=15 // pred_check_branch
          %233 = sbr.rel (%p231) target = $region32
        $region31: #{tpu_custom_call.1} parent=15 // pred_region
          %p234 = scmp.lt.s32.totalorder %s26, 1
          %s235 = scalar_select %p234, %s26, 1
          %s236 = smul.addr %s235, 8
          %s237 = scalar_lea.vmem %s3, %s236
        $region32: #{tpu_custom_call.1} parent=15 // pred_fallthru
          _
      $region16: #{tpu_custom_call.1} parent=5 // pred_fallthru
        _
      %p238 = scmp.le.s32.totalorder 1, %s19
      %p239 = scmp.lt.s32.totalorder %s19, 9
      %p240 = pnand %p238, %p239
      %p241 = pneg %p240
      // Predicated region
      $region33: #{tpu_custom_call.1} parent=5 // pred_check
        _
      $region34: #{tpu_custom_call.1} parent=5 // pred_check_branch
        %243 = sbr.rel (%p240) target = $region36
      $region35: #{tpu_custom_call.1} parent=5 // pred_region
        %s244 = ssub.s32 %s19, 1
        %s245 = sand.u32 %s46, 1
        %s246 = scalar_lea.sflag [#allocation4], %s245
        %s247 = sand.u32 %s46, 1
        %s248 = smul.addr %s247, 8
        %s249 = scalar_lea.vmem [#allocation3], %s248
        // Predicated region
        $region37: #{tpu_custom_call.1} parent=35 // pred_check
          %p250 = pneg %p59
        $region38: #{tpu_custom_call.1} parent=35 // pred_check_branch
          %252 = sbr.rel (%p250) target = $region40
        $region39: #{tpu_custom_call.1} parent=35 // pred_region
          %253 = dma.done %s246, 128
        $region40: #{tpu_custom_call.1} parent=35 // pred_fallthru
          _
        %s254 = sand.u32 %s74, 1
        %s255 = scalar_lea.sflag [#allocation7], %s254
        %s256 = sand.u32 %s74, 1
        %s257 = smul.addr %s256, 8
        %s258 = scalar_lea.vmem [#allocation6], %s257
        // Predicated region
        $region41: #{tpu_custom_call.1} parent=35 // pred_check
          %p259 = pneg %p87
        $region42: #{tpu_custom_call.1} parent=35 // pred_check_branch
          %261 = sbr.rel (%p259) target = $region44
        $region43: #{tpu_custom_call.1} parent=35 // pred_region
          %262 = dma.done %s255, 128
        $region44: #{tpu_custom_call.1} parent=35 // pred_fallthru
          _
        %s263 = sand.u32 %s46, 1
        %s264 = scalar_lea.sflag [#allocation4], %s263
        %s265 = sand.u32 %s46, 1
        %s266 = smul.addr %s265, 8
        %s267 = scalar_lea.vmem [#allocation3], %s266
        %p268 = pneg %p59
        %p269 = pneg %p56
        %s270 = sand.u32 %s74, 1
        %s271 = scalar_lea.sflag [#allocation7], %s270
        %s272 = sand.u32 %s74, 1
        %s273 = smul.addr %s272, 8
        %s274 = scalar_lea.vmem [#allocation6], %s273
        %p275 = pneg %p87
        %p276 = pneg %p84
        %p277 = scmp.lt.s32.totalorder %s28, 1
        %s278 = scalar_select %p277, %s28, 1
        %s279 = smul.addr %s278, 8
        %s280 = scalar_lea.vmem %s2, %s279
        %p281 = pneg %p113
        %p282 = pneg %p110
        %p283 = scmp.lt.s32.totalorder %s28, 1
        %s284 = scalar_select %p283, %s28, 1
        %s285 = smul.addr %s284, 8
        %s286 = scalar_lea.vmem %s3, %s285
        %p287 = pneg %p139
        %p288 = pneg %p136
        %p289 = pneg %p165
        %p290 = pneg %p162
        %s291 = sand.u32 %s152, 1
        %s292 = scalar_lea.sflag [#allocation5], %s291
        %s293 = sand.u32 %s152, 1
        %s294 = smul.addr %s293, 8
        %s295 = scalar_lea.vmem [#allocation8], %s294
        %p296 = scmp.lt.s32.totalorder %s28, 1
        %s297 = scalar_select %p296, %s28, 1
        %s298 = smul.addr %s297, 8
        %s299 = scalar_lea.vmem %s2, %s298
        %p300 = scmp.lt.s32.totalorder %s28, 1
        %s301 = scalar_select %p300, %s28, 1
        %s302 = smul.addr %s301, 8
        %s303 = scalar_lea.vmem %s3, %s302
        %p304 = scmp.eq.s32.totalorder %s29, 0
        // Predicated region
        $region45: #{tpu_custom_call.1} parent=35 // pred_check
          %p305 = pneg %p304
        $region46: #{tpu_custom_call.1} parent=35 // pred_check_branch
          %307 = sbr.rel (%p305) target = $region48
        $region47: #{tpu_custom_call.1} parent=35 // pred_region
          %308 = vst [vmem:[#allocation2] sm:$0xff] 0.0
        $region48: #{tpu_custom_call.1} parent=35 // pred_fallthru
          _
        %v309 = vld [vmem:[%s299] sm:$0xff]
        %311 = vset.pattern.permute.xlu0 0
        %312 = vperm.xlu0 %311, %v309
        %v313 = vpop.permute.xlu0 %312
        %v315 = vld [vmem:[%s303] sm:$0xff]
        %317 = vset.pattern.permute.xlu0 0
        %318 = vperm.xlu0 %317, %v315
        %v319 = vpop.permute.xlu0 %318
        %v321 = vld [vmem:[%s249] sm:$0xff]
        %v322 = vld [vmem:[%s258] sm:$0xff]
        %vm323 = vcmp.ge.f32.partialorder %v322, %v313
        %vm324 = vcmp.le.f32.partialorder %v322, %v319
        %vm325 = vmand %vm323, %vm324
        %v326 = vsel %vm325, %v321, 0.0
        %v327 = vmax.f32 %v321, 0.0
        %v328 = vsub.f32 %v327, %v326
        %v329 = vand.u32 2147483647, %v321
        %v330 = vsub.f32 0.0, %v329
        %v331 = vmul.f32 %v330, 1.442695
        %v332 = vpow.pop %v331
        %v333 = vadd.f32 %v332, 1.0
        %v334 = vlog2.pop %v333
        %v335 = vmul.f32 %v334, 0.6931472
        %v336 = vmul.f32 -0.5, %v332
        %v337 = vadd.f32 %v336, 1.0
        %v338 = vmul.f32 %v337, %v332
        %v339 = vand.u32 2147483647, %v332
        %vm340 = vcmp.lt.f32.partialorder %v339, 0.0004427343
        %v341 = vsel %vm340, %v338, %v335
        %v342 = vadd.f32 %v328, %v341
        %v343 = vld [vmem:[#allocation2] sm:$0xff]
        %v344 = vadd.f32 %v343, %v342
        %345 = vst [vmem:[#allocation2] sm:$0xff] %v344
        %p346 = scmp.eq.s32.totalorder %s29, 3
        // Predicated region
        $region49: #{tpu_custom_call.1} parent=35 // pred_check
          %p347 = pneg %p346
        $region50: #{tpu_custom_call.1} parent=35 // pred_check_branch
          %349 = sbr.rel (%p347) target = $region52
        $region51: #{tpu_custom_call.1} parent=35 // pred_region
          %v350 = vld [vmem:[#allocation2] sm:$0xff]
          %v351 = vadd.f32 %v350, 0.0
          %352 = vst [vmem:[%s295] sm:$0xff] %v351
        $region52: #{tpu_custom_call.1} parent=35 // pred_fallthru
          _
        %s353 = sand.u32 %s152, 1
        %s354 = scalar_lea.sflag [#allocation5], %s353
        %s355 = sand.u32 %s152, 1
        %s356 = smul.addr %s355, 8
        %s357 = scalar_lea.vmem [#allocation8], %s356
        // Predicated region
        $region53: #{tpu_custom_call.1} parent=35 // pred_check
          %p358 = pneg %p162
        $region54: #{tpu_custom_call.1} parent=35 // pred_check_branch
          %360 = sbr.rel (%p358) target = $region56
        $region55: #{tpu_custom_call.1} parent=35 // pred_region
          %s362 = ssub.s32 128, 128
          %363 = vsyncadd %s354, %s362
          %s364 = smul.addr %s28, 128
          %s365 = scalar_lea.hbm %s4, %s364
          %s367 = sshll.u32 %s357, 4
          %s368 = int_to_ptr.vmem [resolvable:$true] %s367
          %370 = dma.vmem_to_hbm [thread:$0]  %s368, 128, %s365, %s354
        $region56: #{tpu_custom_call.1} parent=35 // pred_fallthru
          _
      $region36: #{tpu_custom_call.1} parent=5 // pred_fallthru
        _
      %p371 = scmp.le.s32.totalorder 2, %s19
      // Predicated region
      $region57: #{tpu_custom_call.1} parent=5 // pred_check
        %p372 = pneg %p371
      $region58: #{tpu_custom_call.1} parent=5 // pred_check_branch
        %374 = sbr.rel (%p372) target = $region60
      $region59: #{tpu_custom_call.1} parent=5 // pred_region
        %s375 = ssub.s32 %s19, 2
        // Predicated region
        $region61: #{tpu_custom_call.1} parent=59 // pred_check
          %p376 = pneg %p168
        $region62: #{tpu_custom_call.1} parent=59 // pred_check_branch
          %378 = sbr.rel (%p376) target = $region64
        $region63: #{tpu_custom_call.1} parent=59 // pred_region
          %s379 = sand.u32 %s153, 1
          %s380 = scalar_lea.sflag [#allocation5], %s379
          %s381 = sand.u32 %s153, 1
          %s382 = smul.addr %s381, 8
          %s383 = scalar_lea.vmem [#allocation8], %s382
          %384 = dma.done %s380, 128
        $region64: #{tpu_custom_call.1} parent=59 // pred_fallthru
          _
      $region60: #{tpu_custom_call.1} parent=5 // pred_fallthru
        _
    $region6: #{tpu_custom_call.1} parent=1 // loop_footer
      %s23 = sadd.s32 1, %s19
    $region7: #{tpu_custom_call.1} parent=1 // loop_footer_branch
      %18 = sbr.rel target = $region3
    $region8: #{tpu_custom_call.1} parent=1 // loop_exit
      _
    %385 = vsyncpa [#allocation4], 1
    %s386 = scalar_lea.sflag [#allocation4], 1
    %387 = vsyncpa %s386, 1
    %388 = vsyncpa [#allocation7], 1
    %s389 = scalar_lea.sflag [#allocation7], 1
    %390 = vsyncpa %s389, 1
    %391 = vsyncpa [#allocation5], 1
    %s392 = scalar_lea.sflag [#allocation5], 1
    %393 = vsyncpa %s392, 1

</llo_original>
